<compile_context>
chip_gen: v7x
topology: tpu7x:2x2x1
jax: 0.10.0
libtpu: 0.0.40
codegen_flags: <defaults>
</compile_context>

<pallas_src>
import jax
import jax.numpy as jnp
from jax.experimental import pallas as pl
from jax.experimental.pallas import tpu as pltpu


def _net_kernel(x_ref, w2_ref, pooled_ref, alpha_ref, beta_ref):
    """One grid step processes a block of B patients.

    x_ref      : (B, C, D)  VMEM  patient-code tensors for this block
    w2_ref     : (D, 2)     VMEM  fused weights: col 0 = dim_weight, col 1 = w[:D, 1]
    pooled_ref : (B, 1, D)  VMEM  alpha-pooled code representation
    alpha_ref  : (B, 1, C)  VMEM  attention weights (already PyTorch (·,1,C) layout)
    beta_ref   : (B, 1, C)  VMEM  per-code beta scores
    """
    B = x_ref.shape[0]
    w2 = w2_ref[...]                 # (D, 2), loop-invariant MXU stationary operand

    def body(b, carry):
        xp = x_ref[b]                                            # (C, D)

        # ---- fused alpha/beta projection (MXU) --------------------------
        # x is the MXU *moving* operand; w2 (D, 2) is the single stationary
        # weight tile, reused for every row of x (no per-patient weight-tile
        # reloads of the big (C, D) tile).
        proj = jnp.dot(xp, w2, preferred_element_type=jnp.float32)   # (C, 2)

        # One small f32 relayout turns the (C, 2) column result into
        # lane-dense (2, C) rows so alpha/beta are stored as full-width rows.
        proj_t = proj.T                                          # (2, C)
        alpha_row = jnp.tanh(proj_t[0:1, :])                     # (1, C) dense EUP
        alpha_ref[b] = alpha_row.astype(alpha_ref.dtype)
        beta_ref[b] = proj_t[1:2, :].astype(beta_ref.dtype)

        # ---- pooling (VPU) ----------------------------------------------
        # pooled = alpha @ xp done as a lane-broadcast multiply + reduction
        # over C (~2 VALU ops per x vreg) instead of an M=1 matmul that would
        # push the whole (C, D) tile through the MXU weight path again.
        # (tanh on the (C, 1) column runs on the otherwise-idle EUP slot.)
        a_col = jnp.tanh(proj[:, 0:1])                           # (C, 1)
        pooled = jnp.sum(a_col * xp.astype(jnp.float32),
                         axis=0, keepdims=True)                  # (1, D) f32
        pooled_ref[b] = pooled.astype(pooled_ref.dtype)
        return carry

    # Non-unrolled loop on purpose: each iteration is already a full (C, D)
    # MXU pass + a (C, D) VPU pass (thousands of cycles of schedulable work),
    # and keeping the loop visible bounds the live range of the ~10-16 MB of
    # per-patient f32 intermediates.  (The review's unroll advice targeted the
    # old tiny-matmul loop, which no longer exists.)
    jax.lax.fori_loop(0, B, body, 0)


def _vmem_capacity_bytes():
    try:
        return int(pltpu.get_tpu_info().vmem_capacity_bytes)
    except Exception:
        return 64 << 20   # conservative (v7x-sized) default


def _pad(n, m):
    return ((n + m - 1) // m) * m


def _choose_block_patients(P, C, D, x_itemsize, ab_itemsize, vmem_limit):
    """Pick how many patients to process per grid step.

    Budgeting uses the *padded* VMEM layout (lane dim -> multiple of 128, so
    D=100 counts as 128; sublane dim -> multiple of 8) and accounts for the
    double-buffered x block, the double-buffered output blocks, and the
    per-patient f32 intermediates the kernel materializes.
    """
    d_pad = _pad(D, 128)
    c_pad = _pad(C, 128)
    c_sub = _pad(C, 8)

    # Bytes added to the VMEM footprint per extra patient in the block.
    per_b = (2 * c_sub * d_pad * x_itemsize        # x block, double-buffered
             + 2 * 2 * 8 * c_pad * ab_itemsize     # alpha + beta (B,1,C) blocks, 2 buffers
             + 2 * 8 * d_pad * 4)                  # pooled (B,1,D) block, 2 buffers

    # Per-patient intermediates (independent of B): xp load, the lane-padded
    # (C, 2)/(C, 1) projection columns, and the alpha-weighted x product.
    reserve = int(1.2 * (c_sub * d_pad * x_itemsize
                         + 2 * c_sub * 128 * 4
                         + c_sub * d_pad * 4))
    reserve += _pad(D, 8) * 128 * 4                # w2

    budget = max(per_b, vmem_limit - reserve)
    b_max = max(1, min(P, budget // per_b))

    divisors = [b for b in range(1, P + 1) if P % b == 0 and b <= b_max]
    aligned = [b for b in divisors if b % 8 == 0]
    if aligned:
        return max(aligned)        # sublane-friendly and fewest grid steps
    # Any B is tile-legal: no output block carries B in its last two dims
    # (they use a singleton sublane dim), so fall back to the biggest divisor.
    return max(divisors)


def net_forward(x, x_scaler, dim_weight, w, *, block_patients=None,
                ab_dtype=jnp.float32, interpret=False):
    """Pallas forward pass. Returns (out (P,2), alpha (P,1,C), beta (P,C)).

    x may be float32 or bfloat16.  Accumulation and tanh are always float32;
    for the ~2x HBM-roofline win, store x as bfloat16 *persistently* upstream
    (a per-call astype would re-stream x through HBM and erase the gain).
    alpha/beta can be emitted as bfloat16 via ab_dtype= if the training loop
    tolerates it.
    """
    P, C, D = x.shape
    S = 0 if x_scaler is None else x_scaler.shape[1]
    assert dim_weight.shape == (D, 1)
    assert w.shape == (D + S, 2)

    # Fused projection weights: column 0 -> alpha (pre-tanh), column 1 -> beta.
    # Cast only the MXU inputs; all accumulation stays f32.
    w2 = jnp.concatenate([dim_weight, w[:D, 1:2]], axis=1).astype(x.dtype)   # (D, 2)

    cap = _vmem_capacity_bytes()
    vmem_limit = int(cap * 0.85)
    ab_itemsize = jnp.dtype(ab_dtype).itemsize
    B = block_patients or _choose_block_patients(
        P, C, D, x.dtype.itemsize, ab_itemsize, vmem_limit)
    assert P % B == 0, f"block_patients={B} must divide P={P}"
    grid = (P // B,)

    cost = pl.CostEstimate(
        flops=6 * P * C * D,                        # (C,2) projection + (1,D) pooling
        transcendentals=2 * P * C,                  # tanh (row + column form)
        bytes_accessed=(x.dtype.itemsize * P * C * D    # x read (dominant)
                        + 2 * P * C * ab_itemsize       # alpha, beta writes
                        + 4 * P * D                     # pooled write
                        + 2 * D * x.dtype.itemsize),    # fused weights
    )

    pooled3, alpha3, beta3 = pl.pallas_call(
        _net_kernel,
        out_shape=(
            jax.ShapeDtypeStruct((P, 1, D), jnp.float32),
            jax.ShapeDtypeStruct((P, 1, C), ab_dtype),
            jax.ShapeDtypeStruct((P, 1, C), ab_dtype),
        ),
        grid=grid,
        in_specs=[
            pl.BlockSpec((B, C, D), lambda p: (p, 0, 0)),   # patient block
            pl.BlockSpec((D, 2), lambda p: (0, 0)),         # fused weights (tiny)
        ],
        out_specs=(
            pl.BlockSpec((B, 1, D), lambda p: (p, 0, 0)),
            pl.BlockSpec((B, 1, C), lambda p: (p, 0, 0)),
            pl.BlockSpec((B, 1, C), lambda p: (p, 0, 0)),
        ),
        compiler_params=pltpu.CompilerParams(
            # All output blocks are disjoint per grid step -> patient axis is
            # safe to shard across TensorCores.
            # TODO(synk): on v7x confirm this engages both TCs; else CORE_PARALLEL.
            dimension_semantics=("parallel",),
            vmem_limit_bytes=vmem_limit,
        ),
        cost_estimate=cost,
        interpret=interpret,
    )(x, w2)

    # Tiny final logit matmul in plain XLA; split form avoids the concat copy:
    # concat([pooled, x_scaler], -1) @ w == pooled @ w[:D] + x_scaler @ w[D:].
    pooled = pooled3.reshape(P, D)
    w32 = w.astype(jnp.float32)
    out = pooled @ w32[:D, :]
    if x_scaler is not None:
        out = out + x_scaler.astype(jnp.float32) @ w32[D:, :]

    alpha = alpha3                  # already the PyTorch (P, 1, C) layout
    beta = beta3.reshape(P, C)      # free metadata reshape
    return out, alpha, beta


def net_forward_ref(x, x_scaler, dim_weight, w):
    """Plain-JAX reference mirroring the PyTorch forward exactly (f32)."""
    x = x.astype(jnp.float32)
    D = dim_weight.shape[0]
    alpha = jnp.tanh(jnp.transpose(jnp.matmul(x, dim_weight), (0, 2, 1)))  # (P,1,C)
    pooled = jnp.squeeze(jnp.matmul(alpha, x), axis=1)                     # (P,D)
    cat = jnp.concatenate([pooled, x_scaler], axis=-1)                     # (P,D+S)
    out = jnp.matmul(cat, w)                                               # (P,2)
    beta = jnp.matmul(x, w[:D, 1])                                         # (P,C)
    return out, alpha, beta


def _run_case(key, P, C, D, S, x_dtype, block_patients, ab_dtype, rtol, atol):
    k1, k2, k3, k4 = jax.random.split(key, 4)
    x = jax.random.normal(k1, (P, C, D), dtype=jnp.float32)
    x_scaler = jax.random.normal(k2, (P, S), dtype=jnp.float32)
    dim_weight = jax.random.uniform(k3, (D, 1), jnp.float32, -1.0, 1.0) * (6.0 / D) ** 0.5
    w = jax.random.uniform(k4, (D + S, 2), jnp.float32, -1.0, 1.0) * (6.0 / (D + S)) ** 0.5

    out, alpha, beta = jax.block_until_ready(
        net_forward(x.astype(x_dtype), x_scaler, dim_weight, w,
                    block_patients=block_patients, ab_dtype=ab_dtype))

    ro, ra, rb = net_forward_ref(x, x_scaler, dim_weight, w)
    assert out.shape == (P, 2) and alpha.shape == (P, 1, C) and beta.shape == (P, C)
    assert jnp.allclose(out, ro, rtol=rtol, atol=atol)
    assert jnp.allclose(alpha.astype(jnp.float32), ra, rtol=rtol, atol=atol)
    assert jnp.allclose(beta.astype(jnp.float32), rb, rtol=rtol, atol=atol)


if __name__ == "__main__":
    key = jax.random.PRNGKey(0)
    k_a, k_b, k_c = jax.random.split(key, 3)

    # 1) Small, aligned shapes (patients, codes, code_dim, scaler_dim).
    _run_case(k_a, P=2, C=256, D=128, S=4, x_dtype=jnp.float32,
              block_patients=None, ab_dtype=jnp.float32, rtol=1e-4, atol=1e-4)

    # 2) Production-like padding paths: D=100 (lane-padded to 128), C=1000
    #    (not a multiple of 128), multi-step grid via an explicit block size.
    _run_case(k_b, P=16, C=1000, D=100, S=4, x_dtype=jnp.float32,
              block_patients=8, ab_dtype=jnp.float32, rtol=1e-3, atol=1e-3)

    # 3) bfloat16 x (the intended persistent storage format for the HBM-bound
    #    real shape) with bf16 alpha/beta outputs; loose tolerance vs f32 ref.
    _run_case(k_c, P=16, C=1000, D=100, S=4, x_dtype=jnp.bfloat16,
              block_patients=None, ab_dtype=jnp.bfloat16, rtol=1e-1, atol=1e-1)

    print("KERNEL_OK")
</pallas_src>

<mosaic_0001>
module attributes {stable_mosaic.version = 11 : i64} {
  func.func @_net_kernel(%arg0: i32, %arg1: memref<2x256x128xf32, #tpu.memory_space<vmem>>, %arg2: memref<128x2xf32, #tpu.memory_space<vmem>>, %arg3: memref<2x1x128xf32, #tpu.memory_space<vmem>>, %arg4: memref<2x1x256xf32, #tpu.memory_space<vmem>>, %arg5: memref<2x1x256xf32, #tpu.memory_space<vmem>>) attributes {dimension_semantics = [#tpu.dimension_semantics<parallel>], iteration_bounds = array<i64: 1>, scalar_prefetch = 0 : i64, scratch_operands = 0 : i64, tpu.core_type = #tpu.core_type<tc>, window_params = [{transform_indices = @transform_0, window_bounds = array<i64: 2, 256, 128>}, {pipeline_mode = #tpu.pipeline_mode<synchronous>, transform_indices = @transform_1, window_bounds = array<i64: 128, 2>}, {transform_indices = @transform_2, window_bounds = array<i64: 2, 1, 128>}, {transform_indices = @transform_3, window_bounds = array<i64: 2, 1, 256>}, {transform_indices = @transform_4, window_bounds = array<i64: 2, 1, 256>}]} {
    %c0 = arith.constant 0 : index
    %c0_0 = arith.constant 0 : index
    %0 = vector.load %arg2[%c0, %c0_0] : memref<128x2xf32, #tpu.memory_space<vmem>>, vector<128x2xf32>
    %c0_i32 = arith.constant 0 : i32
    %c2_i32 = arith.constant 2 : i32
    %1 = arith.addi %c0_i32, %c2_i32 : i32
    %c1_i32 = arith.constant 1 : i32
    scf.for %arg6 = %c0_i32 to %1 step %c1_i32  : i32 {
      %2 = arith.index_cast %arg6 : i32 to index
      %c0_2 = arith.constant 0 : index
      %c0_3 = arith.constant 0 : index
      %3 = vector.load %arg1[%2, %c0_2, %c0_3] : memref<2x256x128xf32, #tpu.memory_space<vmem>>, vector<1x256x128xf32>
      %4 = vector.shape_cast %3 : vector<1x256x128xf32> to vector<256x128xf32>
      %cst = arith.constant dense<0.000000e+00> : vector<256x2xf32>
      %5 = tpu.matmul %4, %0, %cst {dimension_numbers = #tpu.dot_dimension_numbers<[1], [0], [0], [1], [0, 0, 1, 1], [], []>} : vector<256x128xf32>, vector<128x2xf32>, vector<256x2xf32> -> vector<256x2xf32>
      %6 = tpu.transpose %5, [1, 0] : vector<256x2xf32> -> vector<2x256xf32>
      %7 = vector.extract_strided_slice %6 {offsets = [0, 0], sizes = [1, 256], strides = [1, 1]} : vector<2x256xf32> to vector<1x256xf32>
      %8 = math.tanh %7 : vector<1x256xf32>
      %9 = arith.index_cast %arg6 : i32 to index
      %c0_4 = arith.constant 0 : index
      %c0_5 = arith.constant 0 : index
      %10 = vector.load %arg4[%9, %c0_4, %c0_5] : memref<2x1x256xf32, #tpu.memory_space<vmem>>, vector<1x1x256xf32>
      %11 = vector.shape_cast %10 : vector<1x1x256xf32> to vector<1x256xf32>
      %12 = vector.shape_cast %8 : vector<1x256xf32> to vector<1x1x256xf32>
      tpu.vector_store %arg4[%9, %c0_4, %c0_5], %12 {strides = array<i32>} : memref<2x1x256xf32, #tpu.memory_space<vmem>>, vector<1x1x256xf32>,
      %13 = vector.extract_strided_slice %6 {offsets = [1, 0], sizes = [1, 256], strides = [1, 1]} : vector<2x256xf32> to vector<1x256xf32>
      %14 = arith.index_cast %arg6 : i32 to index
      %c0_6 = arith.constant 0 : index
      %c0_7 = arith.constant 0 : index
      %15 = vector.load %arg5[%14, %c0_6, %c0_7] : memref<2x1x256xf32, #tpu.memory_space<vmem>>, vector<1x1x256xf32>
      %16 = vector.shape_cast %15 : vector<1x1x256xf32> to vector<1x256xf32>
      %17 = vector.shape_cast %13 : vector<1x256xf32> to vector<1x1x256xf32>
      tpu.vector_store %arg5[%14, %c0_6, %c0_7], %17 {strides = array<i32>} : memref<2x1x256xf32, #tpu.memory_space<vmem>>, vector<1x1x256xf32>,
      %18 = vector.extract_strided_slice %5 {offsets = [0, 0], sizes = [256, 1], strides = [1, 1]} : vector<256x2xf32> to vector<256x1xf32>
      %19 = math.tanh %18 : vector<256x1xf32>
      %20 = vector.broadcast %19 : vector<256x1xf32> to vector<256x128xf32>
      %21 = arith.mulf %20, %4 : vector<256x128xf32>
      %cst_8 = arith.constant dense<0.000000e+00> : vector<128xf32>
      %22 = vector.multi_reduction <add>, %21, %cst_8 [0] : vector<256x128xf32> to vector<128xf32>
      %23 = vector.shape_cast %22 : vector<128xf32> to vector<1x128xf32>
      %24 = arith.index_cast %arg6 : i32 to index
      %c0_9 = arith.constant 0 : index
      %c0_10 = arith.constant 0 : index
      %25 = vector.load %arg3[%24, %c0_9, %c0_10] : memref<2x1x128xf32, #tpu.memory_space<vmem>>, vector<1x1x128xf32>
      %26 = vector.shape_cast %25 : vector<1x1x128xf32> to vector<1x128xf32>
      %27 = vector.shape_cast %23 : vector<1x128xf32> to vector<1x1x128xf32>
      tpu.vector_store %arg3[%24, %c0_9, %c0_10], %27 {strides = array<i32>} : memref<2x1x128xf32, #tpu.memory_space<vmem>>, vector<1x1x128xf32>,
    }
    %c2_i32_1 = arith.constant 2 : i32
    return
  }
  func.func @transform_0(%arg0: i32) -> (i32, i32, i32) {
    %c0_i32 = arith.constant 0 : i32
    %c0_i32_0 = arith.constant 0 : i32
    %c0_i32_1 = arith.constant 0 : i32
    return %arg0, %c0_i32, %c0_i32_0 : i32, i32, i32
  }
  func.func @transform_1(%arg0: i32) -> (i32, i32) {
    %c0_i32 = arith.constant 0 : i32
    %c0_i32_0 = arith.constant 0 : i32
    %c0_i32_1 = arith.constant 0 : i32
    return %c0_i32, %c0_i32_0 : i32, i32
  }
  func.func @transform_2(%arg0: i32) -> (i32, i32, i32) {
    %c0_i32 = arith.constant 0 : i32
    %c0_i32_0 = arith.constant 0 : i32
    %c0_i32_1 = arith.constant 0 : i32
    return %arg0, %c0_i32, %c0_i32_0 : i32, i32, i32
  }
  func.func @transform_3(%arg0: i32) -> (i32, i32, i32) {
    %c0_i32 = arith.constant 0 : i32
    %c0_i32_0 = arith.constant 0 : i32
    %c0_i32_1 = arith.constant 0 : i32
    return %arg0, %c0_i32, %c0_i32_0 : i32, i32, i32
  }
  func.func @transform_4(%arg0: i32) -> (i32, i32, i32) {
    %c0_i32 = arith.constant 0 : i32
    %c0_i32_0 = arith.constant 0 : i32
    %c0_i32_1 = arith.constant 0 : i32
    return %arg0, %c0_i32, %c0_i32_0 : i32, i32, i32
  }
}

</mosaic_0001>

<llo_original>
// kernel: tpu_custom_call.1
$region0: #{tpu_custom_call.1}
  #allocation0 [shape = 'u32[]', space=smem, size = 0x4, offset = 0x4, fixed_abs, tag = 'smem constant byte address 0x4 - core index']
  #allocation1 [shape = 'u32[144,128]{1,0:T(1,128)}', space=vmem, size = 0x12000, scoped, tag = 'internal scratch']
  %s0 = inlined_call_operand.hbm [shape: f32[2,256,128], index: 0, kind: input, shape index: {}]
  %s1 = inlined_call_operand.vmem [shape: f32[128,2], index: 1, kind: input, shape index: {}]
  %s2 = inlined_call_operand.hbm [shape: f32[2,1,128], index: 2, kind: output, shape index: {0}]
  %s3 = inlined_call_operand.hbm [shape: f32[2,1,256], index: 3, kind: output, shape index: {1}]
  %s4 = inlined_call_operand.hbm [shape: f32[2,1,256], index: 4, kind: output, shape index: {2}]
  %5 = xla_tuple %s2, %s3, %s4
  %s6 = sld [smem:[#allocation0]]
  $region45: #{tpu_custom_call.1} parent=0
    _
  %s8 = ssub.s32 1, %s6
  %s9 = scalar_select 0, %s8, %s6
  $region1: #{tpu_custom_call.1} parent=0
    #allocation2 [shape = 'u8[262144]{0}', space=vmem, size = 0x40000, scoped, tag = 'input window, operand 0, single buffered']
    #allocation3 [shape = 's32[1]{0}', space=sflag, size = 0x4, scoped, tag = 'scoped memory for tpu_custom_call.1']
    #allocation4 [shape = 's32[1]{0}', space=sflag, size = 0x4, scoped, tag = 'scoped memory for tpu_custom_call.1']
    #allocation5 [shape = 'u8[1024]{0}', space=vmem, size = 0x400, scoped, tag = 'output window, operand 0, single buffered']
    #allocation6 [shape = 'u8[2048]{0}', space=vmem, size = 0x800, scoped, tag = 'output window, operand 1, single buffered']
    #allocation7 [shape = 's32[1]{0}', space=sflag, size = 0x4, scoped, tag = 'scoped memory for tpu_custom_call.1']
    #allocation8 [shape = 'u8[2048]{0}', space=vmem, size = 0x800, scoped, tag = 'output window, operand 2, single buffered']
    %10 = vsyncpa [#allocation3], 0
    %11 = vsyncpa [#allocation4], 0
    %12 = vsyncpa [#allocation7], 0
    // Predicated region
    $region2: #{tpu_custom_call.1} parent=1 // pred_check
      _
    $region3: #{tpu_custom_call.1} parent=1 // pred_check_branch
      %14 = sbr.rel (0) target = $region5
    $region4: #{tpu_custom_call.1} parent=1 // pred_region
      %s16 = ssub.s32 8192, 8192
      %17 = vsyncadd [#allocation3], %s16
      %s18 = sshll.u32 [#allocation2], 4
      %s19 = int_to_ptr.vmem [resolvable:$true] %s18
      %24 = dma.hbm_to_vmem [thread:$0]  %s0, 8192, %s19, [#allocation3], 128, 128, 8
    $region5: #{tpu_custom_call.1} parent=1 // pred_fallthru
      _
    // Predicated region
    $region6: #{tpu_custom_call.1} parent=1 // pred_check
      _
    $region7: #{tpu_custom_call.1} parent=1 // pred_check_branch
      %26 = sbr.rel (0) target = $region9
    $region8: #{tpu_custom_call.1} parent=1 // pred_region
      _
    $region9: #{tpu_custom_call.1} parent=1 // pred_fallthru
      _
    // Predicated region
    $region10: #{tpu_custom_call.1} parent=1 // pred_check
      _
    $region11: #{tpu_custom_call.1} parent=1 // pred_check_branch
      %28 = sbr.rel (0) target = $region13
    $region12: #{tpu_custom_call.1} parent=1 // pred_region
      %29 = dma.done [#allocation3], 8192
    $region13: #{tpu_custom_call.1} parent=1 // pred_fallthru
      _
    %v30 = vld [vmem:[%s1] sm:$0xff]
    %v31 = vld [vmem:[%s1 + $0x8] sm:$0xff]
    %v32 = vld [vmem:[%s1 + $0x10] sm:$0xff]
    %v33 = vld [vmem:[%s1 + $0x18] sm:$0xff]
    %v34 = vld [vmem:[%s1 + $0x20] sm:$0xff]
    %v35 = vld [vmem:[%s1 + $0x28] sm:$0xff]
    %v36 = vld [vmem:[%s1 + $0x30] sm:$0xff]
    %v37 = vld [vmem:[%s1 + $0x38] sm:$0xff]
    %v38 = vld [vmem:[%s1 + $0x40] sm:$0xff]
    %v39 = vld [vmem:[%s1 + $0x48] sm:$0xff]
    %v40 = vld [vmem:[%s1 + $0x50] sm:$0xff]
    %v41 = vld [vmem:[%s1 + $0x58] sm:$0xff]
    %v42 = vld [vmem:[%s1 + $0x60] sm:$0xff]
    %v43 = vld [vmem:[%s1 + $0x68] sm:$0xff]
    %v44 = vld [vmem:[%s1 + $0x70] sm:$0xff]
    %v45 = vld [vmem:[%s1 + $0x78] sm:$0xff]
    loop: start=0, step=1, limit=2
    $region14: #{tpu_custom_call.1} parent=1 // loop_pre_header
      _
    $region15: #{tpu_custom_call.1} parent=1 // loop_header
      %s47 = sphi 0, %s51
      %p48 = scmp.ge.s32.totalorder %s47, 2
    $region16: #{tpu_custom_call.1} parent=1 // loop_header_branch
      %50 = sbr.rel (%p48) target = $region20
    $region17: #{tpu_custom_call.1} parent=1 // loop_body
      %s52 = smul.u32 %s47, 256
      %s53 = scalar_lea.vmem [#allocation2], %s52
      %v54 = vld [vmem:[%s53] sm:$0xff]
      %v55 = vld [vmem:[%s53 + $0x8] sm:$0xff]
      %v56 = vld [vmem:[%s53 + $0x10] sm:$0xff]
      %v57 = vld [vmem:[%s53 + $0x18] sm:$0xff]
      %v58 = vld [vmem:[%s53 + $0x20] sm:$0xff]
      %v59 = vld [vmem:[%s53 + $0x28] sm:$0xff]
      %v60 = vld [vmem:[%s53 + $0x30] sm:$0xff]
      %v61 = vld [vmem:[%s53 + $0x38] sm:$0xff]
      %v62 = vld [vmem:[%s53 + $0x40] sm:$0xff]
      %v63 = vld [vmem:[%s53 + $0x48] sm:$0xff]
      %v64 = vld [vmem:[%s53 + $0x50] sm:$0xff]
      %v65 = vld [vmem:[%s53 + $0x58] sm:$0xff]
      %v66 = vld [vmem:[%s53 + $0x60] sm:$0xff]
      %v67 = vld [vmem:[%s53 + $0x68] sm:$0xff]
      %v68 = vld [vmem:[%s53 + $0x70] sm:$0xff]
      %v69 = vld [vmem:[%s53 + $0x78] sm:$0xff]
      %v70 = vld [vmem:[%s53 + $0x80] sm:$0xff]
      %v71 = vld [vmem:[%s53 + $0x88] sm:$0xff]
      %v72 = vld [vmem:[%s53 + $0x90] sm:$0xff]
      %v73 = vld [vmem:[%s53 + $0x98] sm:$0xff]
      %v74 = vld [vmem:[%s53 + $0xa0] sm:$0xff]
      %v75 = vld [vmem:[%s53 + $0xa8] sm:$0xff]
      %v76 = vld [vmem:[%s53 + $0xb0] sm:$0xff]
      %v77 = vld [vmem:[%s53 + $0xb8] sm:$0xff]
      %v78 = vld [vmem:[%s53 + $0xc0] sm:$0xff]
      %v79 = vld [vmem:[%s53 + $0xc8] sm:$0xff]
      %v80 = vld [vmem:[%s53 + $0xd0] sm:$0xff]
      %v81 = vld [vmem:[%s53 + $0xd8] sm:$0xff]
      %v82 = vld [vmem:[%s53 + $0xe0] sm:$0xff]
      %v83 = vld [vmem:[%s53 + $0xe8] sm:$0xff]
      %v84 = vld [vmem:[%s53 + $0xf0] sm:$0xff]
      %v85 = vld [vmem:[%s53 + $0xf8] sm:$0xff]
      %86 = vmatprep.subr.mxu0 0.0
      %87 = vmatpush1.msra.mxu0 %v30
      %88 = vmatprep.subr.mxu0 0.0
      %89 = vmatpush1.msra.mxu0 %v31
      %90 = vmatprep.subr.mxu0 0.0
      %91 = vmatpush1.msra.mxu0 %v32
      %92 = vmatprep.subr.mxu0 0.0
      %93 = vmatpush1.msra.mxu0 %v33
      %94 = vmatprep.subr.mxu0 0.0
      %95 = vmatpush1.msra.mxu0 %v34
      %96 = vmatprep.subr.mxu0 0.0
      %97 = vmatpush1.msra.mxu0 %v35
      %98 = vmatprep.subr.mxu0 0.0
      %99 = vmatpush1.msra.mxu0 %v36
      %100 = vmatprep.subr.mxu0 0.0
      %101 = vmatpush1.msra.mxu0 %v37
      %102 = vmatprep.subr.mxu0 0.0
      %103 = vmatpush1.msra.mxu0 %v38
      %104 = vmatprep.subr.mxu0 0.0
      %105 = vmatpush1.msra.mxu0 %v39
      %106 = vmatprep.subr.mxu0 0.0
      %107 = vmatpush1.msra.mxu0 %v40
      %108 = vmatprep.subr.mxu0 0.0
      %109 = vmatpush1.msra.mxu0 %v41
      %110 = vmatprep.subr.mxu0 0.0
      %111 = vmatpush1.msra.mxu0 %v42
      %112 = vmatprep.subr.mxu0 0.0
      %113 = vmatpush1.msra.mxu0 %v43
      %114 = vmatprep.subr.mxu0 0.0
      %115 = vmatpush1.msra.mxu0 %v44
      %116 = vmatprep.subr.mxu0 0.0
      %117 = vmatpush1.msra.mxu0 %v45
      %118 = vmatprep.subr.mxu0 0.0
      %119 = vmatpush1.msra.mxu0 0.0
      %120 = vmatprep.subr.mxu0 0.0
      %121 = vmatpush1.msra.mxu0 0.0
      %122 = vmatprep.subr.mxu0 0.0
      %123 = vmatpush1.msra.mxu0 0.0
      %124 = vmatprep.subr.mxu0 0.0
      %125 = vmatpush1.msra.mxu0 0.0
      %126 = vmatprep.subr.mxu0 0.0
      %127 = vmatpush1.msra.mxu0 0.0
      %128 = vmatprep.subr.mxu0 0.0
      %129 = vmatpush1.msra.mxu0 0.0
      %130 = vmatprep.subr.mxu0 0.0
      %131 = vmatpush1.msra.mxu0 0.0
      %132 = vmatprep.subr.mxu0 0.0
      %133 = vmatpush1.msra.mxu0 0.0
      %134 = vmatprep.subr.mxu0 0.0
      %135 = vmatpush1.msra.mxu0 0.0
      %136 = vmatprep.subr.mxu0 0.0
      %137 = vmatpush1.msra.mxu0 0.0
      %138 = vmatprep.subr.mxu0 0.0
      %139 = vmatpush1.msra.mxu0 0.0
      %140 = vmatprep.subr.mxu0 0.0
      %141 = vmatpush1.msra.mxu0 0.0
      %142 = vmatprep.subr.mxu0 0.0
      %143 = vmatpush1.msra.mxu0 0.0
      %144 = vmatprep.subr.mxu0 0.0
      %145 = vmatpush1.msra.mxu0 0.0
      %146 = vmatprep.subr.mxu0 0.0
      %147 = vmatpush1.msra.mxu0 0.0
      %148 = vmatprep.subr.mxu0 0.0
      %149 = vmatpush1.msra.mxu0 0.0
      %150 = vmatprep.mubr.f32.mxu0 0.0
      %151 = vmatmul.mubr.f32.gmra.mrb[0].mxu0 %v54
      %v152 = vpop.f32.mrb[0].mxu0
      %v153 = vadd.f32 0.0, %v152
      %v154 = vpop.f32.mrb[0].mxu0
      %155 = vmatprep.mubr.f32.mxu0 0.0
      %156 = vmatmul.mubr.f32.gmra.mrb[0].mxu0 %v55
      %v157 = vpop.f32.mrb[0].mxu0
      %v158 = vadd.f32 0.0, %v157
      %v159 = vpop.f32.mrb[0].mxu0
      %160 = vmatprep.mubr.f32.mxu0 0.0
      %161 = vmatmul.mubr.f32.gmra.mrb[0].mxu0 %v56
      %v162 = vpop.f32.mrb[0].mxu0
      %v163 = vadd.f32 0.0, %v162
      %v164 = vpop.f32.mrb[0].mxu0
      %165 = vmatprep.mubr.f32.mxu0 0.0
      %166 = vmatmul.mubr.f32.gmra.mrb[0].mxu0 %v57
      %v167 = vpop.f32.mrb[0].mxu0
      %v168 = vadd.f32 0.0, %v167
      %v169 = vpop.f32.mrb[0].mxu0
      %170 = vmatprep.mubr.f32.mxu0 0.0
      %171 = vmatmul.mubr.f32.gmra.mrb[0].mxu0 %v58
      %v172 = vpop.f32.mrb[0].mxu0
      %v173 = vadd.f32 0.0, %v172
      %v174 = vpop.f32.mrb[0].mxu0
      %175 = vmatprep.mubr.f32.mxu0 0.0
      %176 = vmatmul.mubr.f32.gmra.mrb[0].mxu0 %v59
      %v177 = vpop.f32.mrb[0].mxu0
      %v178 = vadd.f32 0.0, %v177
      %v179 = vpop.f32.mrb[0].mxu0
      %180 = vmatprep.mubr.f32.mxu0 0.0
      %181 = vmatmul.mubr.f32.gmra.mrb[0].mxu0 %v60
      %v182 = vpop.f32.mrb[0].mxu0
      %v183 = vadd.f32 0.0, %v182
      %v184 = vpop.f32.mrb[0].mxu0
      %185 = vmatprep.mubr.f32.mxu0 0.0
      %186 = vmatmul.mubr.f32.gmra.mrb[0].mxu0 %v61
      %v187 = vpop.f32.mrb[0].mxu0
      %v188 = vadd.f32 0.0, %v187
      %v189 = vpop.f32.mrb[0].mxu0
      %190 = vmatprep.mubr.f32.mxu0 0.0
      %191 = vmatmul.mubr.f32.gmra.mrb[0].mxu0 %v62
      %v192 = vpop.f32.mrb[0].mxu0
      %v193 = vadd.f32 0.0, %v192
      %v194 = vpop.f32.mrb[0].mxu0
      %195 = vmatprep.mubr.f32.mxu0 0.0
      %196 = vmatmul.mubr.f32.gmra.mrb[0].mxu0 %v63
      %v197 = vpop.f32.mrb[0].mxu0
      %v198 = vadd.f32 0.0, %v197
      %v199 = vpop.f32.mrb[0].mxu0
      %200 = vmatprep.mubr.f32.mxu0 0.0
      %201 = vmatmul.mubr.f32.gmra.mrb[0].mxu0 %v64
      %v202 = vpop.f32.mrb[0].mxu0
      %v203 = vadd.f32 0.0, %v202
      %v204 = vpop.f32.mrb[0].mxu0
      %205 = vmatprep.mubr.f32.mxu0 0.0
      %206 = vmatmul.mubr.f32.gmra.mrb[0].mxu0 %v65
      %v207 = vpop.f32.mrb[0].mxu0
      %v208 = vadd.f32 0.0, %v207
      %v209 = vpop.f32.mrb[0].mxu0
      %210 = vmatprep.mubr.f32.mxu0 0.0
      %211 = vmatmul.mubr.f32.gmra.mrb[0].mxu0 %v66
      %v212 = vpop.f32.mrb[0].mxu0
      %v213 = vadd.f32 0.0, %v212
      %v214 = vpop.f32.mrb[0].mxu0
      %215 = vmatprep.mubr.f32.mxu0 0.0
      %216 = vmatmul.mubr.f32.gmra.mrb[0].mxu0 %v67
      %v217 = vpop.f32.mrb[0].mxu0
      %v218 = vadd.f32 0.0, %v217
      %v219 = vpop.f32.mrb[0].mxu0
      %220 = vmatprep.mubr.f32.mxu0 0.0
      %221 = vmatmul.mubr.f32.gmra.mrb[0].mxu0 %v68
      %v222 = vpop.f32.mrb[0].mxu0
      %v223 = vadd.f32 0.0, %v222
      %v224 = vpop.f32.mrb[0].mxu0
      %225 = vmatprep.mubr.f32.mxu0 0.0
      %226 = vmatmul.mubr.f32.gmra.mrb[0].mxu0 %v69
      %v227 = vpop.f32.mrb[0].mxu0
      %v228 = vadd.f32 0.0, %v227
      %v229 = vpop.f32.mrb[0].mxu0
      %230 = vmatprep.mubr.f32.mxu0 0.0
      %231 = vmatmul.mubr.f32.gmra.mrb[0].mxu0 %v70
      %v232 = vpop.f32.mrb[0].mxu0
      %v233 = vadd.f32 0.0, %v232
      %v234 = vpop.f32.mrb[0].mxu0
      %235 = vmatprep.mubr.f32.mxu0 0.0
      %236 = vmatmul.mubr.f32.gmra.mrb[0].mxu0 %v71
      %v237 = vpop.f32.mrb[0].mxu0
      %v238 = vadd.f32 0.0, %v237
      %v239 = vpop.f32.mrb[0].mxu0
      %240 = vmatprep.mubr.f32.mxu0 0.0
      %241 = vmatmul.mubr.f32.gmra.mrb[0].mxu0 %v72
      %v242 = vpop.f32.mrb[0].mxu0
      %v243 = vadd.f32 0.0, %v242
      %v244 = vpop.f32.mrb[0].mxu0
      %245 = vmatprep.mubr.f32.mxu0 0.0
      %246 = vmatmul.mubr.f32.gmra.mrb[0].mxu0 %v73
      %v247 = vpop.f32.mrb[0].mxu0
      %v248 = vadd.f32 0.0, %v247
      %v249 = vpop.f32.mrb[0].mxu0
      %250 = vmatprep.mubr.f32.mxu0 0.0
      %251 = vmatmul.mubr.f32.gmra.mrb[0].mxu0 %v74
      %v252 = vpop.f32.mrb[0].mxu0
      %v253 = vadd.f32 0.0, %v252
      %v254 = vpop.f32.mrb[0].mxu0
      %255 = vmatprep.mubr.f32.mxu0 0.0
      %256 = vmatmul.mubr.f32.gmra.mrb[0].mxu0 %v75
      %v257 = vpop.f32.mrb[0].mxu0
      %v258 = vadd.f32 0.0, %v257
      %v259 = vpop.f32.mrb[0].mxu0
      %260 = vmatprep.mubr.f32.mxu0 0.0
      %261 = vmatmul.mubr.f32.gmra.mrb[0].mxu0 %v76
      %v262 = vpop.f32.mrb[0].mxu0
      %v263 = vadd.f32 0.0, %v262
      %v264 = vpop.f32.mrb[0].mxu0
      %265 = vmatprep.mubr.f32.mxu0 0.0
      %266 = vmatmul.mubr.f32.gmra.mrb[0].mxu0 %v77
      %v267 = vpop.f32.mrb[0].mxu0
      %v268 = vadd.f32 0.0, %v267
      %v269 = vpop.f32.mrb[0].mxu0
      %270 = vmatprep.mubr.f32.mxu0 0.0
      %271 = vmatmul.mubr.f32.gmra.mrb[0].mxu0 %v78
      %v272 = vpop.f32.mrb[0].mxu0
      %v273 = vadd.f32 0.0, %v272
      %v274 = vpop.f32.mrb[0].mxu0
      %275 = vmatprep.mubr.f32.mxu0 0.0
      %276 = vmatmul.mubr.f32.gmra.mrb[0].mxu0 %v79
      %v277 = vpop.f32.mrb[0].mxu0
      %v278 = vadd.f32 0.0, %v277
      %v279 = vpop.f32.mrb[0].mxu0
      %280 = vmatprep.mubr.f32.mxu0 0.0
      %281 = vmatmul.mubr.f32.gmra.mrb[0].mxu0 %v80
      %v282 = vpop.f32.mrb[0].mxu0
      %v283 = vadd.f32 0.0, %v282
      %v284 = vpop.f32.mrb[0].mxu0
      %285 = vmatprep.mubr.f32.mxu0 0.0
      %286 = vmatmul.mubr.f32.gmra.mrb[0].mxu0 %v81
      %v287 = vpop.f32.mrb[0].mxu0
      %v288 = vadd.f32 0.0, %v287
      %v289 = vpop.f32.mrb[0].mxu0
      %290 = vmatprep.mubr.f32.mxu0 0.0
      %291 = vmatmul.mubr.f32.gmra.mrb[0].mxu0 %v82
      %v292 = vpop.f32.mrb[0].mxu0
      %v293 = vadd.f32 0.0, %v292
      %v294 = vpop.f32.mrb[0].mxu0
      %295 = vmatprep.mubr.f32.mxu0 0.0
      %296 = vmatmul.mubr.f32.gmra.mrb[0].mxu0 %v83
      %v297 = vpop.f32.mrb[0].mxu0
      %v298 = vadd.f32 0.0, %v297
      %v299 = vpop.f32.mrb[0].mxu0
      %300 = vmatprep.mubr.f32.mxu0 0.0
      %301 = vmatmul.mubr.f32.gmra.mrb[0].mxu0 %v84
      %v302 = vpop.f32.mrb[0].mxu0
      %v303 = vadd.f32 0.0, %v302
      %v304 = vpop.f32.mrb[0].mxu0
      %305 = vmatprep.mubr.f32.mxu0 0.0
      %306 = vmatmul.mubr.f32.gmra.mrb[0].mxu0 %v85
      %v307 = vpop.f32.mrb[0].mxu0
      %v308 = vadd.f32 0.0, %v307
      %v309 = vpop.f32.mrb[0].mxu0
      %310 = vdwg.mxu0
      %311 = vxpose.xlu0.b32.start [1/16] %v153, 128
      %312 = vxpose.xlu0.b32.cont [2/16] %v158, 128
      %313 = vxpose.xlu0.b32.cont [3/16] %v163, 128
      %314 = vxpose.xlu0.b32.cont [4/16] %v168, 128
      %315 = vxpose.xlu0.b32.cont [5/16] %v173, 128
      %316 = vxpose.xlu0.b32.cont [6/16] %v178, 128
      %317 = vxpose.xlu0.b32.cont [7/16] %v183, 128
      %318 = vxpose.xlu0.b32.cont [8/16] %v188, 128
      %319 = vxpose.xlu0.b32.cont [9/16] %v193, 128
      %320 = vxpose.xlu0.b32.cont [10/16] %v198, 128
      %321 = vxpose.xlu0.b32.cont [11/16] %v203, 128
      %322 = vxpose.xlu0.b32.cont [12/16] %v208, 128
      %323 = vxpose.xlu0.b32.cont [13/16] %v213, 128
      %324 = vxpose.xlu0.b32.cont [14/16] %v218, 128
      %325 = vxpose.xlu0.b32.cont [15/16] %v223, 128
      %326 = vxpose.xlu0.b32.end [16/16] %v228, 128
      %v327 = vpop.trf.xlu0
      %v328 = vpop.trf.xlu0
      %v329 = vpop.trf.xlu0
      %v330 = vpop.trf.xlu0
      %v331 = vpop.trf.xlu0
      %v332 = vpop.trf.xlu0
      %v333 = vpop.trf.xlu0
      %v334 = vpop.trf.xlu0
      %v335 = vpop.trf.xlu0
      %v336 = vpop.trf.xlu0
      %v337 = vpop.trf.xlu0
      %v338 = vpop.trf.xlu0
      %v339 = vpop.trf.xlu0
      %v340 = vpop.trf.xlu0
      %v341 = vpop.trf.xlu0
      %v342 = vpop.trf.xlu0
      %343 = vxpose.xlu0.b32.start [1/16] %v233, 128
      %344 = vxpose.xlu0.b32.cont [2/16] %v238, 128
      %345 = vxpose.xlu0.b32.cont [3/16] %v243, 128
      %346 = vxpose.xlu0.b32.cont [4/16] %v248, 128
      %347 = vxpose.xlu0.b32.cont [5/16] %v253, 128
      %348 = vxpose.xlu0.b32.cont [6/16] %v258, 128
      %349 = vxpose.xlu0.b32.cont [7/16] %v263, 128
      %350 = vxpose.xlu0.b32.cont [8/16] %v268, 128
      %351 = vxpose.xlu0.b32.cont [9/16] %v273, 128
      %352 = vxpose.xlu0.b32.cont [10/16] %v278, 128
      %353 = vxpose.xlu0.b32.cont [11/16] %v283, 128
      %354 = vxpose.xlu0.b32.cont [12/16] %v288, 128
      %355 = vxpose.xlu0.b32.cont [13/16] %v293, 128
      %356 = vxpose.xlu0.b32.cont [14/16] %v298, 128
      %357 = vxpose.xlu0.b32.cont [15/16] %v303, 128
      %358 = vxpose.xlu0.b32.end [16/16] %v308, 128
      %v359 = vpop.trf.xlu0
      %v360 = vpop.trf.xlu0
      %v361 = vpop.trf.xlu0
      %v362 = vpop.trf.xlu0
      %v363 = vpop.trf.xlu0
      %v364 = vpop.trf.xlu0
      %v365 = vpop.trf.xlu0
      %v366 = vpop.trf.xlu0
      %v367 = vpop.trf.xlu0
      %v368 = vpop.trf.xlu0
      %v369 = vpop.trf.xlu0
      %v370 = vpop.trf.xlu0
      %v371 = vpop.trf.xlu0
      %v372 = vpop.trf.xlu0
      %v373 = vpop.trf.xlu0
      %v374 = vpop.trf.xlu0
      %v375 = vtanh.pop %v327
      %v376 = vtanh.pop %v359
      %v379 = vcombine.low %v375, %v376
      %v381 = vunpack.c.l.s4 1966171168
      %v382 = vunpack.c.0.s8 %v381
      %v383 = vlaneseq
      %v384 = vshrl.u32 %v383, 7
      %v385 = vsub.s32 %v382, %v384
      %v386 = vrot.slane %v379, %v385
      %v388 = vunpack.c.l.s4 1966171168
      %v389 = vunpack.c.0.s8 %v388
      %v390 = vlaneseq
      %v391 = vshrl.u32 %v390, 7
      %v392 = vsub.s32 %v389, %v391
      %v393 = vrot.slane %v386, %v392
      %s395 = smul.u32 %s47, 2
      %s396 = scalar_lea.vmem [#allocation6], %s395
      %v397 = vlaneseq
      %vm398 = vcmp.ge.s32.totalorder %v397, 0
      %vm399 = vcmp.lt.s32.totalorder %v397, 256
      %vm400 = vmand %vm398, %vm399
      %401 = vst.msk [vmem:[%s396] sm:$0x3] %vm400, %v393
      %v404 = vcombine.low %v327, %v359
      %v406 = vunpack.c.l.s4 1966171168
      %v407 = vunpack.c.0.s8 %v406
      %v408 = vlaneseq
      %v409 = vshrl.u32 %v408, 7
      %v410 = vsub.s32 %v407, %v409
      %v411 = vrot.slane %v404, %v410
      %v412 = vcombine.high %v411, %v411
      %v414 = vunpack.c.l.s4 1966171168
      %v415 = vunpack.c.0.s8 %v414
      %v416 = vlaneseq
      %v417 = vshrl.u32 %v416, 7
      %v418 = vsub.s32 %v415, %v417
      %v419 = vrot.slane %v412, %v418
      %s421 = scalar_lea.vmem [#allocation8], %s395
      %422 = vst.msk [vmem:[%s421] sm:$0x3] %vm400, %v419
      %v423 = vtanh.pop %v153
      %v424 = vtanh.pop %v158
      %v425 = vtanh.pop %v163
      %v426 = vtanh.pop %v168
      %v427 = vtanh.pop %v173
      %v428 = vtanh.pop %v178
      %v429 = vtanh.pop %v183
      %v430 = vtanh.pop %v188
      %v431 = vtanh.pop %v193
      %v432 = vtanh.pop %v198
      %v433 = vtanh.pop %v203
      %v434 = vtanh.pop %v208
      %v435 = vtanh.pop %v213
      %v436 = vtanh.pop %v218
      %v437 = vtanh.pop %v223
      %v438 = vtanh.pop %v228
      %v439 = vtanh.pop %v233
      %v440 = vtanh.pop %v238
      %v441 = vtanh.pop %v243
      %v442 = vtanh.pop %v248
      %v443 = vtanh.pop %v253
      %v444 = vtanh.pop %v258
      %v445 = vtanh.pop %v263
      %v446 = vtanh.pop %v268
      %v447 = vtanh.pop %v273
      %v448 = vtanh.pop %v278
      %v449 = vtanh.pop %v283
      %v450 = vtanh.pop %v288
      %v451 = vtanh.pop %v293
      %v452 = vtanh.pop %v298
      %v453 = vtanh.pop %v303
      %v454 = vtanh.pop %v308
      %456 = vset.pattern.permute.xlu0 0
      %457 = vperm.xlu0 %456, %v423
      %v458 = vpop.permute.xlu0 %457
      %461 = vset.pattern.permute.xlu0 0
      %462 = vperm.xlu0 %461, %v424
      %v463 = vpop.permute.xlu0 %462
      %466 = vset.pattern.permute.xlu0 0
      %467 = vperm.xlu0 %466, %v425
      %v468 = vpop.permute.xlu0 %467
      %471 = vset.pattern.permute.xlu0 0
      %472 = vperm.xlu0 %471, %v426
      %v473 = vpop.permute.xlu0 %472
      %476 = vset.pattern.permute.xlu0 0
      %477 = vperm.xlu0 %476, %v427
      %v478 = vpop.permute.xlu0 %477
      %481 = vset.pattern.permute.xlu0 0
      %482 = vperm.xlu0 %481, %v428
      %v483 = vpop.permute.xlu0 %482
      %486 = vset.pattern.permute.xlu0 0
      %487 = vperm.xlu0 %486, %v429
      %v488 = vpop.permute.xlu0 %487
      %491 = vset.pattern.permute.xlu0 0
      %492 = vperm.xlu0 %491, %v430
      %v493 = vpop.permute.xlu0 %492
      %496 = vset.pattern.permute.xlu0 0
      %497 = vperm.xlu0 %496, %v431
      %v498 = vpop.permute.xlu0 %497
      %501 = vset.pattern.permute.xlu0 0
      %502 = vperm.xlu0 %501, %v432
      %v503 = vpop.permute.xlu0 %502
      %506 = vset.pattern.permute.xlu0 0
      %507 = vperm.xlu0 %506, %v433
      %v508 = vpop.permute.xlu0 %507
      %511 = vset.pattern.permute.xlu0 0
      %512 = vperm.xlu0 %511, %v434
      %v513 = vpop.permute.xlu0 %512
      %516 = vset.pattern.permute.xlu0 0
      %517 = vperm.xlu0 %516, %v435
      %v518 = vpop.permute.xlu0 %517
      %521 = vset.pattern.permute.xlu0 0
      %522 = vperm.xlu0 %521, %v436
      %v523 = vpop.permute.xlu0 %522
      %526 = vset.pattern.permute.xlu0 0
      %527 = vperm.xlu0 %526, %v437
      %v528 = vpop.permute.xlu0 %527
      %531 = vset.pattern.permute.xlu0 0
      %532 = vperm.xlu0 %531, %v438
      %v533 = vpop.permute.xlu0 %532
      %536 = vset.pattern.permute.xlu0 0
      %537 = vperm.xlu0 %536, %v439
      %v538 = vpop.permute.xlu0 %537
      %541 = vset.pattern.permute.xlu0 0
      %542 = vperm.xlu0 %541, %v440
      %v543 = vpop.permute.xlu0 %542
      %546 = vset.pattern.permute.xlu0 0
      %547 = vperm.xlu0 %546, %v441
      %v548 = vpop.permute.xlu0 %547
      %551 = vset.pattern.permute.xlu0 0
      %552 = vperm.xlu0 %551, %v442
      %v553 = vpop.permute.xlu0 %552
      %556 = vset.pattern.permute.xlu0 0
      %557 = vperm.xlu0 %556, %v443
      %v558 = vpop.permute.xlu0 %557
      %561 = vset.pattern.permute.xlu0 0
      %562 = vperm.xlu0 %561, %v444
      %v563 = vpop.permute.xlu0 %562
      %566 = vset.pattern.permute.xlu0 0
      %567 = vperm.xlu0 %566, %v445
      %v568 = vpop.permute.xlu0 %567
      %571 = vset.pattern.permute.xlu0 0
      %572 = vperm.xlu0 %571, %v446
      %v573 = vpop.permute.xlu0 %572
      %576 = vset.pattern.permute.xlu0 0
      %577 = vperm.xlu0 %576, %v447
      %v578 = vpop.permute.xlu0 %577
      %581 = vset.pattern.permute.xlu0 0
      %582 = vperm.xlu0 %581, %v448
      %v583 = vpop.permute.xlu0 %582
      %586 = vset.pattern.permute.xlu0 0
      %587 = vperm.xlu0 %586, %v449
      %v588 = vpop.permute.xlu0 %587
      %591 = vset.pattern.permute.xlu0 0
      %592 = vperm.xlu0 %591, %v450
      %v593 = vpop.permute.xlu0 %592
      %596 = vset.pattern.permute.xlu0 0
      %597 = vperm.xlu0 %596, %v451
      %v598 = vpop.permute.xlu0 %597
      %601 = vset.pattern.permute.xlu0 0
      %602 = vperm.xlu0 %601, %v452
      %v603 = vpop.permute.xlu0 %602
      %606 = vset.pattern.permute.xlu0 0
      %607 = vperm.xlu0 %606, %v453
      %v608 = vpop.permute.xlu0 %607
      %611 = vset.pattern.permute.xlu0 0
      %612 = vperm.xlu0 %611, %v454
      %v613 = vpop.permute.xlu0 %612
      %v615 = vmul.f32 %v458, %v54
      %v616 = vmul.f32 %v463, %v55
      %v617 = vmul.f32 %v468, %v56
      %v618 = vmul.f32 %v473, %v57
      %v619 = vmul.f32 %v478, %v58
      %v620 = vmul.f32 %v483, %v59
      %v621 = vmul.f32 %v488, %v60
      %v622 = vmul.f32 %v493, %v61
      %v623 = vmul.f32 %v498, %v62
      %v624 = vmul.f32 %v503, %v63
      %v625 = vmul.f32 %v508, %v64
      %v626 = vmul.f32 %v513, %v65
      %v627 = vmul.f32 %v518, %v66
      %v628 = vmul.f32 %v523, %v67
      %v629 = vmul.f32 %v528, %v68
      %v630 = vmul.f32 %v533, %v69
      %v631 = vmul.f32 %v538, %v70
      %v632 = vmul.f32 %v543, %v71
      %v633 = vmul.f32 %v548, %v72
      %v634 = vmul.f32 %v553, %v73
      %v635 = vmul.f32 %v558, %v74
      %v636 = vmul.f32 %v563, %v75
      %v637 = vmul.f32 %v568, %v76
      %v638 = vmul.f32 %v573, %v77
      %v639 = vmul.f32 %v578, %v78
      %v640 = vmul.f32 %v583, %v79
      %v641 = vmul.f32 %v588, %v80
      %v642 = vmul.f32 %v593, %v81
      %v643 = vmul.f32 %v598, %v82
      %v644 = vmul.f32 %v603, %v83
      %v645 = vmul.f32 %v608, %v84
      %v646 = vmul.f32 %v613, %v85
      %v647 = vadd.f32 %v615, %v616
      %v648 = vadd.f32 %v647, %v617
      %v649 = vadd.f32 %v648, %v618
      %v650 = vadd.f32 %v649, %v619
      %v651 = vadd.f32 %v650, %v620
      %v652 = vadd.f32 %v651, %v621
      %v653 = vadd.f32 %v652, %v622
      %v654 = vadd.f32 %v653, %v623
      %v655 = vadd.f32 %v654, %v624
      %v656 = vadd.f32 %v655, %v625
      %v657 = vadd.f32 %v656, %v626
      %v658 = vadd.f32 %v657, %v627
      %v659 = vadd.f32 %v658, %v628
      %v660 = vadd.f32 %v659, %v629
      %v661 = vadd.f32 %v660, %v630
      %v662 = vadd.f32 %v661, %v631
      %v663 = vadd.f32 %v662, %v632
      %v664 = vadd.f32 %v663, %v633
      %v665 = vadd.f32 %v664, %v634
      %v666 = vadd.f32 %v665, %v635
      %v667 = vadd.f32 %v666, %v636
      %v668 = vadd.f32 %v667, %v637
      %v669 = vadd.f32 %v668, %v638
      %v670 = vadd.f32 %v669, %v639
      %v671 = vadd.f32 %v670, %v640
      %v672 = vadd.f32 %v671, %v641
      %v673 = vadd.f32 %v672, %v642
      %v674 = vadd.f32 %v673, %v643
      %v675 = vadd.f32 %v674, %v644
      %v676 = vadd.f32 %v675, %v645
      %v677 = vadd.f32 %v676, %v646
      %v678 = vrot.slane %v677, 4
      %v679 = vadd.f32 %v677, %v678
      %v680 = vrot.slane %v679, 2
      %v681 = vadd.f32 %v679, %v680
      %v682 = vrot.slane %v681, 1
      %v683 = vadd.f32 %v681, %v682
      %s684 = scalar_lea.vmem [#allocation5], %s47
      %685 = vst [vmem:[%s684] sm:$0x1] %v683
    $region18: #{tpu_custom_call.1} parent=1 // loop_footer
      %s51 = sadd.s32 1, %s47
    $region19: #{tpu_custom_call.1} parent=1 // loop_footer_branch
      %46 = sbr.rel target = $region15
    $region20: #{tpu_custom_call.1} parent=1 // loop_exit
      _
    // Predicated region
    $region21: #{tpu_custom_call.1} parent=1 // pred_check
      _
    $region22: #{tpu_custom_call.1} parent=1 // pred_check_branch
      %687 = sbr.rel (0) target = $region24
    $region23: #{tpu_custom_call.1} parent=1 // pred_region
      %s689 = ssub.s32 32, 32
      %690 = vsyncadd [#allocation4], %s689
      %s691 = sshll.u32 [#allocation5], 4
      %s692 = int_to_ptr.vmem [resolvable:$true] %s691
      %697 = dma.vmem_to_hbm [thread:$0]  %s692, 32, %s2, [#allocation4], 16, 16, 1
    $region24: #{tpu_custom_call.1} parent=1 // pred_fallthru
      _
    // Predicated region
    $region25: #{tpu_custom_call.1} parent=1 // pred_check
      _
    $region26: #{tpu_custom_call.1} parent=1 // pred_check_branch
      %699 = sbr.rel (0) target = $region28
    $region27: #{tpu_custom_call.1} parent=1 // pred_region
      %s701 = ssub.s32 64, 64
      %702 = vsyncadd [#allocation7], %s701
      %s703 = sshll.u32 [#allocation6], 4
      %s704 = int_to_ptr.vmem [resolvable:$true] %s703
      %709 = dma.vmem_to_hbm [thread:$0]  %s704, 64, %s3, [#allocation7], 32, 32, 2
    $region28: #{tpu_custom_call.1} parent=1 // pred_fallthru
      _
    // Predicated region
    $region29: #{tpu_custom_call.1} parent=1 // pred_check
      _
    $region30: #{tpu_custom_call.1} parent=1 // pred_check_branch
      %711 = sbr.rel (0) target = $region32
    $region31: #{tpu_custom_call.1} parent=1 // pred_region
      %s713 = ssub.s32 64, 64
      %714 = vsyncadd [#allocation7], %s713
      %s715 = sshll.u32 [#allocation8], 4
      %s716 = int_to_ptr.vmem [resolvable:$true] %s715
      %721 = dma.vmem_to_hbm [thread:$0]  %s716, 64, %s4, [#allocation7], 32, 32, 2
    $region32: #{tpu_custom_call.1} parent=1 // pred_fallthru
      _
    // Predicated region
    $region33: #{tpu_custom_call.1} parent=1 // pred_check
      _
    $region34: #{tpu_custom_call.1} parent=1 // pred_check_branch
      %723 = sbr.rel (0) target = $region36
    $region35: #{tpu_custom_call.1} parent=1 // pred_region
      %724 = dma.done [#allocation4], 32
    $region36: #{tpu_custom_call.1} parent=1 // pred_fallthru
      _
    // Predicated region
    $region37: #{tpu_custom_call.1} parent=1 // pred_check
      _
    $region38: #{tpu_custom_call.1} parent=1 // pred_check_branch
      %726 = sbr.rel (0) target = $region40
    $region39: #{tpu_custom_call.1} parent=1 // pred_region
      %727 = dma.done [#allocation7], 64
    $region40: #{tpu_custom_call.1} parent=1 // pred_fallthru
      _
    // Predicated region
    $region41: #{tpu_custom_call.1} parent=1 // pred_check
      _
    $region42: #{tpu_custom_call.1} parent=1 // pred_check_branch
      %729 = sbr.rel (0) target = $region44
    $region43: #{tpu_custom_call.1} parent=1 // pred_region
      %730 = dma.done [#allocation7], 64
    $region44: #{tpu_custom_call.1} parent=1 // pred_fallthru
      _
    %731 = vsyncpa [#allocation3], 1
    %732 = vsyncpa [#allocation4], 1
    %733 = vsyncpa [#allocation7], 1

</llo_original>
